<compile_context>
chip_gen: v7x
topology: tpu7x:2x2x1
jax: 0.10.0
libtpu: 0.0.40
codegen_flags: <defaults>
</compile_context>

<pallas_src>
import jax
import jax.numpy as jnp
from jax.experimental import pallas as pl
from jax.experimental.pallas import tpu as pltpu


def edgeconv_kernel(slab_ref, w1_ref, w2h_ref, w2x_ref, out_ref):
    # slab_ref : (F_aug, tile)   feature-major per-edge slab, last row is constant 1
    # w1_ref   : (N_hiddens, F_aug)   [W1 | 0 | 2*b1]
    # w2h_ref  : (E_hiddens, N_hiddens)
    # w2x_ref  : (E_hiddens, F_aug)   [0 | W2_attr | W2_f | b2]
    slab = slab_ref[...]

    # lin1(x_j) + lin1(x_i) == W1 @ (x_j + x_i) + 2*b1   (bias via the ones row)
    h = jnp.maximum(
        jnp.dot(w1_ref[...], slab, preferred_element_type=jnp.float32), 0.0)

    # lin2(concat(h, edge_attr, edge_f)) == W2h @ h + W2x @ slab   (b2 via the ones row)
    o = jnp.dot(w2h_ref[...], h.astype(w2h_ref.dtype),
                preferred_element_type=jnp.float32)
    o = o + jnp.dot(w2x_ref[...], slab, preferred_element_type=jnp.float32)
    out_ref[...] = o.astype(out_ref.dtype)


def edgeconvf_forward(x, edge_index, edge_f, edge_attr, params, *,
                      edge_tile=512, compute_dtype=jnp.float32):
    """x:(N, N_in)  edge_index:(2, E) int32  edge_f:(E, Ef)  edge_attr:(E, E_in)."""
    w1, b1, w2, b2 = params["w1"], params["b1"], params["w2"], params["b2"]
    N_hiddens, N_in = w1.shape
    E_hiddens, in_channels = w2.shape
    E_in = edge_attr.shape[1]
    Ef = edge_f.shape[1]
    assert in_channels == N_hiddens + E_in + Ef
    E = edge_index.shape[1]
    F_aug = N_in + E_in + Ef + 1          # per-edge features + constant-1 (bias) row

    # ---- glue (plain JAX): fused gather+add, build ONE per-edge slab --------------
    x_sum = (jnp.take(x, edge_index[0], axis=0) +
             jnp.take(x, edge_index[1], axis=0))                       # (E, N_in)
    ones = jnp.ones((E, 1), x.dtype)
    slab = jnp.concatenate([x_sum, edge_attr, edge_f, ones], axis=1)   # (E, F_aug)

    # ---- edge tiling: edges live on the lane axis, so tile must be a 128-multiple --
    LANE = 128
    e_lane = ((E + LANE - 1) // LANE) * LANE
    edge_tile = min(edge_tile, e_lane)
    edge_tile = max(LANE, (edge_tile // LANE) * LANE)
    E_pad = ((E + edge_tile - 1) // edge_tile) * edge_tile
    if E_pad != E:
        slab = jnp.pad(slab, ((0, E_pad - E), (0, 0)))                 # zero tail rows
    slab_fm = slab.T.astype(compute_dtype)                             # (F_aug, E_pad)

    # ---- fold parameters into two feature-major weights (biases via the ones row) --
    w1p = jnp.concatenate(
        [w1, jnp.zeros((N_hiddens, E_in + Ef), w1.dtype),
         (2.0 * b1).reshape(N_hiddens, 1)], axis=1).astype(compute_dtype)   # (Nh, F_aug)
    w2h = w2[:, :N_hiddens].astype(compute_dtype)                           # (Eh, Nh)
    w2x = jnp.concatenate(
        [jnp.zeros((E_hiddens, N_in), w2.dtype),
         w2[:, N_hiddens:],
         b2.reshape(E_hiddens, 1)], axis=1).astype(compute_dtype)           # (Eh, F_aug)

    grid = (E_pad // edge_tile,)
    edge_block = lambda rows: pl.BlockSpec((rows, edge_tile), lambda i: (0, i))
    full_block = lambda shp: pl.BlockSpec(shp, lambda i: (0, 0))

    out_fm = pl.pallas_call(
        edgeconv_kernel,
        out_shape=jax.ShapeDtypeStruct((E_hiddens, E_pad), jnp.float32),
        grid_spec=pltpu.PrefetchScalarGridSpec(
            num_scalar_prefetch=0,
            grid=grid,
            in_specs=[
                edge_block(F_aug),                    # per-edge slab (lane-dense)
                full_block((N_hiddens, F_aug)),       # [W1 | 0 | 2*b1]
                full_block((E_hiddens, N_hiddens)),   # W2 node-embedding part
                full_block((E_hiddens, F_aug)),       # [0 | W2_attr | W2_f | b2]
            ],
            out_specs=edge_block(E_hiddens),          # lane-dense output block
        ),
        compiler_params=pltpu.CompilerParams(
            dimension_semantics=("parallel",)),
    )(slab_fm, w1p, w2h, w2x)

    # back to edge-major (E, E_hiddens), dropping the padded edges
    return out_fm[:, :E].T


def reference_forward(x, edge_index, edge_f, edge_attr, params):
    """Pure-JAX replica of the PyTorch loop (vectorized) for validation."""
    w1, b1, w2, b2 = params["w1"], params["b1"], params["w2"], params["b2"]
    x_j = x[edge_index[0]]
    x_i = x[edge_index[1]]
    lin1 = lambda v: v @ w1.T + b1
    x_em = jax.nn.relu(lin1(x_j) + lin1(x_i))
    feat = jnp.concatenate([x_em, edge_attr, edge_f], axis=1)
    return feat @ w2.T + b2


if __name__ == "__main__":
    # module hyper-parameters (small, consistent with the constructor)
    N_in = 8          # node input feature dim
    N_hiddens = 32    # node hidden dim (lin1 out)
    E_in = 4          # edge_attr feature dim
    Ef = 4            # edge_f feature dim
    E_hiddens = 16    # edge hidden dim (lin2 out)
    in_channels = N_hiddens + E_in + Ef

    num_nodes = 16
    num_edges = 64

    key = jax.random.PRNGKey(0)
    k = jax.random.split(key, 8)

    # deterministic synthetic parameters (PyTorch nn.Linear weight shapes)
    params = {
        "w1": jax.random.normal(k[0], (N_hiddens, N_in), jnp.float32) * 0.1,
        "b1": jax.random.normal(k[1], (N_hiddens,), jnp.float32) * 0.1,
        "w2": jax.random.normal(k[2], (E_hiddens, in_channels), jnp.float32) * 0.1,
        "b2": jax.random.normal(k[3], (E_hiddens,), jnp.float32) * 0.1,
    }

    # deterministic inputs
    x = jax.random.normal(k[4], (num_nodes, N_in), jnp.float32)
    edge_index = jax.random.randint(k[5], (2, num_edges), 0, num_nodes, jnp.int32)
    edge_attr = jax.random.normal(k[6], (num_edges, E_in), jnp.float32)
    edge_f = jax.random.normal(k[7], (num_edges, Ef), jnp.float32)

    out = edgeconvf_forward(x, edge_index, edge_f, edge_attr, params)
    out = jax.block_until_ready(out)

    ref = reference_forward(x, edge_index, edge_f, edge_attr, params)
    assert out.shape == (num_edges, E_hiddens)
    assert jnp.allclose(out, ref, atol=1e-4, rtol=1e-4)

    print("KERNEL_OK")
</pallas_src>

<mosaic_0001>
module attributes {stable_mosaic.version = 11 : i64} {
  func.func @edgeconv_kernel(%arg0: i32, %arg1: memref<17x128xf32, #tpu.memory_space<vmem>>, %arg2: memref<32x17xf32, #tpu.memory_space<vmem>>, %arg3: memref<16x32xf32, #tpu.memory_space<vmem>>, %arg4: memref<16x17xf32, #tpu.memory_space<vmem>>, %arg5: memref<16x128xf32, #tpu.memory_space<vmem>>) attributes {dimension_semantics = [#tpu.dimension_semantics<parallel>], iteration_bounds = array<i64: 1>, scalar_prefetch = 0 : i64, scratch_operands = 0 : i64, tpu.core_type = #tpu.core_type<tc>, window_params = [{transform_indices = @transform_0, window_bounds = array<i64: 17, 128>}, {pipeline_mode = #tpu.pipeline_mode<synchronous>, transform_indices = @transform_1, window_bounds = array<i64: 32, 17>}, {pipeline_mode = #tpu.pipeline_mode<synchronous>, transform_indices = @transform_2, window_bounds = array<i64: 16, 32>}, {pipeline_mode = #tpu.pipeline_mode<synchronous>, transform_indices = @transform_3, window_bounds = array<i64: 16, 17>}, {transform_indices = @transform_4, window_bounds = array<i64: 16, 128>}]} {
    %c0 = arith.constant 0 : index
    %c0_0 = arith.constant 0 : index
    %0 = vector.load %arg1[%c0, %c0_0] : memref<17x128xf32, #tpu.memory_space<vmem>>, vector<17x128xf32>
    %c0_1 = arith.constant 0 : index
    %c0_2 = arith.constant 0 : index
    %1 = vector.load %arg2[%c0_1, %c0_2] : memref<32x17xf32, #tpu.memory_space<vmem>>, vector<32x17xf32>
    %cst = arith.constant dense<0.000000e+00> : vector<32x128xf32>
    %2 = tpu.matmul %1, %0, %cst {dimension_numbers = #tpu.dot_dimension_numbers<[1], [0], [0], [1], [0, 0, 1, 1], [], []>} : vector<32x17xf32>, vector<17x128xf32>, vector<32x128xf32> -> vector<32x128xf32>
    %cst_3 = arith.constant 0.000000e+00 : f32
    %3 = vector.broadcast %cst_3 : f32 to vector<32x128xf32>
    %4 = arith.maximumf %2, %3 : vector<32x128xf32>
    %c0_4 = arith.constant 0 : index
    %c0_5 = arith.constant 0 : index
    %5 = vector.load %arg3[%c0_4, %c0_5] : memref<16x32xf32, #tpu.memory_space<vmem>>, vector<16x32xf32>
    %cst_6 = arith.constant dense<0.000000e+00> : vector<16x128xf32>
    %6 = tpu.matmul %5, %4, %cst_6 {dimension_numbers = #tpu.dot_dimension_numbers<[1], [0], [0], [1], [0, 0, 1, 1], [], []>} : vector<16x32xf32>, vector<32x128xf32>, vector<16x128xf32> -> vector<16x128xf32>
    %c0_7 = arith.constant 0 : index
    %c0_8 = arith.constant 0 : index
    %7 = vector.load %arg4[%c0_7, %c0_8] : memref<16x17xf32, #tpu.memory_space<vmem>>, vector<16x17xf32>
    %cst_9 = arith.constant dense<0.000000e+00> : vector<16x128xf32>
    %8 = tpu.matmul %7, %0, %cst_9 {dimension_numbers = #tpu.dot_dimension_numbers<[1], [0], [0], [1], [0, 0, 1, 1], [], []>} : vector<16x17xf32>, vector<17x128xf32>, vector<16x128xf32> -> vector<16x128xf32>
    %9 = arith.addf %6, %8 : vector<16x128xf32>
    %c0_10 = arith.constant 0 : index
    %c0_11 = arith.constant 0 : index
    %10 = vector.load %arg5[%c0_10, %c0_11] : memref<16x128xf32, #tpu.memory_space<vmem>>, vector<16x128xf32>
    tpu.vector_store %arg5[%c0_10, %c0_11], %9 {strides = array<i32>} : memref<16x128xf32, #tpu.memory_space<vmem>>, vector<16x128xf32>,
    return
  }
  func.func @transform_0(%arg0: i32) -> (i32, i32) {
    %c0_i32 = arith.constant 0 : i32
    %c0_i32_0 = arith.constant 0 : i32
    return %c0_i32, %arg0 : i32, i32
  }
  func.func @transform_1(%arg0: i32) -> (i32, i32) {
    %c0_i32 = arith.constant 0 : i32
    %c0_i32_0 = arith.constant 0 : i32
    %c0_i32_1 = arith.constant 0 : i32
    return %c0_i32, %c0_i32_0 : i32, i32
  }
  func.func @transform_2(%arg0: i32) -> (i32, i32) {
    %c0_i32 = arith.constant 0 : i32
    %c0_i32_0 = arith.constant 0 : i32
    %c0_i32_1 = arith.constant 0 : i32
    return %c0_i32, %c0_i32_0 : i32, i32
  }
  func.func @transform_3(%arg0: i32) -> (i32, i32) {
    %c0_i32 = arith.constant 0 : i32
    %c0_i32_0 = arith.constant 0 : i32
    %c0_i32_1 = arith.constant 0 : i32
    return %c0_i32, %c0_i32_0 : i32, i32
  }
  func.func @transform_4(%arg0: i32) -> (i32, i32) {
    %c0_i32 = arith.constant 0 : i32
    %c0_i32_0 = arith.constant 0 : i32
    return %c0_i32, %arg0 : i32, i32
  }
}

</mosaic_0001>

<llo_original>
// kernel: tpu_custom_call.1
$region0: #{tpu_custom_call.1}
  #allocation0 [shape = 'u32[]', space=smem, size = 0x4, offset = 0x4, fixed_abs, tag = 'smem constant byte address 0x4 - core index']
  #allocation1 [shape = 'u32[144,128]{1,0:T(1,128)}', space=vmem, size = 0x12000, scoped, tag = 'internal scratch']
  %s0 = inlined_call_operand.vmem [shape: f32[17,128], index: 0, kind: input, shape index: {}]
  %s1 = inlined_call_operand.vmem [shape: f32[32,17], index: 1, kind: input, shape index: {}]
  %s2 = inlined_call_operand.vmem [shape: f32[16,32], index: 2, kind: input, shape index: {}]
  %s3 = inlined_call_operand.vmem [shape: f32[16,17], index: 3, kind: input, shape index: {}]
  %s4 = inlined_call_operand.hbm [shape: f32[16,128], index: 4, kind: output, shape index: {}]
  %s5 = sld [smem:[#allocation0]]
  $region26: #{tpu_custom_call.1} parent=0
    _
  %s7 = ssub.s32 1, %s5
  %s8 = scalar_select 0, %s7, %s5
  $region1: #{tpu_custom_call.1} parent=0
    #allocation2 [shape = 'u8[8192]{0}', space=vmem, size = 0x2000, scoped, tag = 'output window, operand 0, single buffered']
    #allocation3 [shape = 's32[1]{0}', space=sflag, size = 0x4, scoped, tag = 'scoped memory for tpu_custom_call.1']
    %9 = vsyncpa [#allocation3], 0
    // Predicated region
    $region2: #{tpu_custom_call.1} parent=1 // pred_check
      _
    $region3: #{tpu_custom_call.1} parent=1 // pred_check_branch
      %11 = sbr.rel (0) target = $region5
    $region4: #{tpu_custom_call.1} parent=1 // pred_region
      _
    $region5: #{tpu_custom_call.1} parent=1 // pred_fallthru
      _
    // Predicated region
    $region6: #{tpu_custom_call.1} parent=1 // pred_check
      _
    $region7: #{tpu_custom_call.1} parent=1 // pred_check_branch
      %13 = sbr.rel (0) target = $region9
    $region8: #{tpu_custom_call.1} parent=1 // pred_region
      _
    $region9: #{tpu_custom_call.1} parent=1 // pred_fallthru
      _
    // Predicated region
    $region10: #{tpu_custom_call.1} parent=1 // pred_check
      _
    $region11: #{tpu_custom_call.1} parent=1 // pred_check_branch
      %15 = sbr.rel (0) target = $region13
    $region12: #{tpu_custom_call.1} parent=1 // pred_region
      _
    $region13: #{tpu_custom_call.1} parent=1 // pred_fallthru
      _
    // Predicated region
    $region14: #{tpu_custom_call.1} parent=1 // pred_check
      _
    $region15: #{tpu_custom_call.1} parent=1 // pred_check_branch
      %17 = sbr.rel (0) target = $region17
    $region16: #{tpu_custom_call.1} parent=1 // pred_region
      _
    $region17: #{tpu_custom_call.1} parent=1 // pred_fallthru
      _
    %v18 = vld [vmem:[%s0] sm:$0xff]
    %v19 = vld [vmem:[%s0 + $0x8] sm:$0xff]
    %v20 = vld [vmem:[%s0 + $0x10] sm:$0x1]
    %v21 = vld [vmem:[%s1] sm:$0xff]
    %v22 = vld [vmem:[%s1 + $0x8] sm:$0xff]
    %v23 = vld [vmem:[%s1 + $0x10] sm:$0xff]
    %v24 = vld [vmem:[%s1 + $0x18] sm:$0xff]
    %vm25 = vcmask 138240
    %v27 = vsel %vm25, %v21, 0
    %v30 = vsel %vm25, %v22, 0
    %v33 = vsel %vm25, %v23, 0
    %v36 = vsel %vm25, %v24, 0
    %vm38 = vcmask 1040384
    %v40 = vsel %vm38, %v20, 0
    %42 = vmatprep.subr.mxu0 0.0
    %43 = vmatpush1.msra.mxu0 %v18
    %44 = vmatprep.subr.mxu0 0.0
    %45 = vmatpush1.msra.mxu0 %v19
    %46 = vmatprep.subr.mxu0 0.0
    %47 = vmatpush1.msra.mxu0 %v40
    %48 = vmatprep.subr.mxu0 0.0
    %49 = vmatpush1.msra.mxu0 0.0
    %50 = vmatprep.subr.mxu0 0.0
    %51 = vmatpush1.msra.mxu0 0.0
    %52 = vmatprep.subr.mxu0 0.0
    %53 = vmatpush1.msra.mxu0 0.0
    %54 = vmatprep.subr.mxu0 0.0
    %55 = vmatpush1.msra.mxu0 0.0
    %56 = vmatprep.subr.mxu0 0.0
    %57 = vmatpush1.msra.mxu0 0.0
    %58 = vmatprep.subr.mxu0 0.0
    %59 = vmatpush1.msra.mxu0 0.0
    %60 = vmatprep.subr.mxu0 0.0
    %61 = vmatpush1.msra.mxu0 0.0
    %62 = vmatprep.subr.mxu0 0.0
    %63 = vmatpush1.msra.mxu0 0.0
    %64 = vmatprep.subr.mxu0 0.0
    %65 = vmatpush1.msra.mxu0 0.0
    %66 = vmatprep.subr.mxu0 0.0
    %67 = vmatpush1.msra.mxu0 0.0
    %68 = vmatprep.subr.mxu0 0.0
    %69 = vmatpush1.msra.mxu0 0.0
    %70 = vmatprep.subr.mxu0 0.0
    %71 = vmatpush1.msra.mxu0 0.0
    %72 = vmatprep.subr.mxu0 0.0
    %73 = vmatpush1.msra.mxu0 0.0
    %74 = vmatprep.subr.mxu0 0.0
    %75 = vmatpush1.msra.mxu0 0.0
    %76 = vmatprep.subr.mxu0 0.0
    %77 = vmatpush1.msra.mxu0 0.0
    %78 = vmatprep.subr.mxu0 0.0
    %79 = vmatpush1.msra.mxu0 0.0
    %80 = vmatprep.subr.mxu0 0.0
    %81 = vmatpush1.msra.mxu0 0.0
    %82 = vmatprep.subr.mxu0 0.0
    %83 = vmatpush1.msra.mxu0 0.0
    %84 = vmatprep.subr.mxu0 0.0
    %85 = vmatpush1.msra.mxu0 0.0
    %86 = vmatprep.subr.mxu0 0.0
    %87 = vmatpush1.msra.mxu0 0.0
    %88 = vmatprep.subr.mxu0 0.0
    %89 = vmatpush1.msra.mxu0 0.0
    %90 = vmatprep.subr.mxu0 0.0
    %91 = vmatpush1.msra.mxu0 0.0
    %92 = vmatprep.subr.mxu0 0.0
    %93 = vmatpush1.msra.mxu0 0.0
    %94 = vmatprep.subr.mxu0 0.0
    %95 = vmatpush1.msra.mxu0 0.0
    %96 = vmatprep.subr.mxu0 0.0
    %97 = vmatpush1.msra.mxu0 0.0
    %98 = vmatprep.subr.mxu0 0.0
    %99 = vmatpush1.msra.mxu0 0.0
    %100 = vmatprep.subr.mxu0 0.0
    %101 = vmatpush1.msra.mxu0 0.0
    %102 = vmatprep.subr.mxu0 0.0
    %103 = vmatpush1.msra.mxu0 0.0
    %104 = vmatprep.subr.mxu0 0.0
    %105 = vmatpush1.msra.mxu0 0.0
    %106 = vmatprep.mubr.f32.mxu0 0.0
    %107 = vmatmul.mubr.f32.gmra.mrb[0].mxu0 %v27
    %v108 = vpop.f32.mrb[0].mxu0
    %v109 = vadd.f32 0.0, %v108
    %v110 = vpop.f32.mrb[0].mxu0
    %111 = vmatprep.mubr.f32.mxu0 0.0
    %112 = vmatmul.mubr.f32.gmra.mrb[0].mxu0 %v30
    %v113 = vpop.f32.mrb[0].mxu0
    %v114 = vadd.f32 0.0, %v113
    %v115 = vpop.f32.mrb[0].mxu0
    %116 = vmatprep.mubr.f32.mxu0 0.0
    %117 = vmatmul.mubr.f32.gmra.mrb[0].mxu0 %v33
    %v118 = vpop.f32.mrb[0].mxu0
    %v119 = vadd.f32 0.0, %v118
    %v120 = vpop.f32.mrb[0].mxu0
    %121 = vmatprep.mubr.f32.mxu0 0.0
    %122 = vmatmul.mubr.f32.gmra.mrb[0].mxu0 %v36
    %v123 = vpop.f32.mrb[0].mxu0
    %v124 = vadd.f32 0.0, %v123
    %v125 = vpop.f32.mrb[0].mxu0
    %126 = vdwg.mxu0
    %v127 = vmax.f32 %v109, 0.0
    %v128 = vmax.f32 %v114, 0.0
    %v129 = vmax.f32 %v119, 0.0
    %v130 = vmax.f32 %v124, 0.0
    %v131 = vld [vmem:[%s2] sm:$0xff]
    %v132 = vld [vmem:[%s2 + $0x8] sm:$0xff]
    %v133 = vld [vmem:[%s3] sm:$0xff]
    %v134 = vld [vmem:[%s3 + $0x8] sm:$0xff]
    %v136 = vsel %vm25, %v133, 0
    %v139 = vsel %vm25, %v134, 0
    %141 = vmatprep.subr.mxu0 0.0
    %142 = vmatpush1.msra.mxu0 %v18
    %143 = vmatprep.subr.mxu0 0.0
    %144 = vmatpush1.msra.mxu0 %v19
    %145 = vmatprep.subr.mxu0 0.0
    %146 = vmatpush1.msra.mxu0 %v40
    %147 = vmatprep.subr.mxu0 0.0
    %148 = vmatpush1.msra.mxu0 0.0
    %149 = vmatprep.subr.mxu0 0.0
    %150 = vmatpush1.msra.mxu0 0.0
    %151 = vmatprep.subr.mxu0 0.0
    %152 = vmatpush1.msra.mxu0 0.0
    %153 = vmatprep.subr.mxu0 0.0
    %154 = vmatpush1.msra.mxu0 0.0
    %155 = vmatprep.subr.mxu0 0.0
    %156 = vmatpush1.msra.mxu0 0.0
    %157 = vmatprep.subr.mxu0 0.0
    %158 = vmatpush1.msra.mxu0 0.0
    %159 = vmatprep.subr.mxu0 0.0
    %160 = vmatpush1.msra.mxu0 0.0
    %161 = vmatprep.subr.mxu0 0.0
    %162 = vmatpush1.msra.mxu0 0.0
    %163 = vmatprep.subr.mxu0 0.0
    %164 = vmatpush1.msra.mxu0 0.0
    %165 = vmatprep.subr.mxu0 0.0
    %166 = vmatpush1.msra.mxu0 0.0
    %167 = vmatprep.subr.mxu0 0.0
    %168 = vmatpush1.msra.mxu0 0.0
    %169 = vmatprep.subr.mxu0 0.0
    %170 = vmatpush1.msra.mxu0 0.0
    %171 = vmatprep.subr.mxu0 0.0
    %172 = vmatpush1.msra.mxu0 0.0
    %173 = vmatprep.subr.mxu0 0.0
    %174 = vmatpush1.msra.mxu0 0.0
    %175 = vmatprep.subr.mxu0 0.0
    %176 = vmatpush1.msra.mxu0 0.0
    %177 = vmatprep.subr.mxu0 0.0
    %178 = vmatpush1.msra.mxu0 0.0
    %179 = vmatprep.subr.mxu0 0.0
    %180 = vmatpush1.msra.mxu0 0.0
    %181 = vmatprep.subr.mxu0 0.0
    %182 = vmatpush1.msra.mxu0 0.0
    %183 = vmatprep.subr.mxu0 0.0
    %184 = vmatpush1.msra.mxu0 0.0
    %185 = vmatprep.subr.mxu0 0.0
    %186 = vmatpush1.msra.mxu0 0.0
    %187 = vmatprep.subr.mxu0 0.0
    %188 = vmatpush1.msra.mxu0 0.0
    %189 = vmatprep.subr.mxu0 0.0
    %190 = vmatpush1.msra.mxu0 0.0
    %191 = vmatprep.subr.mxu0 0.0
    %192 = vmatpush1.msra.mxu0 0.0
    %193 = vmatprep.subr.mxu0 0.0
    %194 = vmatpush1.msra.mxu0 0.0
    %195 = vmatprep.subr.mxu0 0.0
    %196 = vmatpush1.msra.mxu0 0.0
    %197 = vmatprep.subr.mxu0 0.0
    %198 = vmatpush1.msra.mxu0 0.0
    %199 = vmatprep.subr.mxu0 0.0
    %200 = vmatpush1.msra.mxu0 0.0
    %201 = vmatprep.subr.mxu0 0.0
    %202 = vmatpush1.msra.mxu0 0.0
    %203 = vmatprep.subr.mxu0 0.0
    %204 = vmatpush1.msra.mxu0 0.0
    %205 = vmatprep.mubr.f32.mxu0 0.0
    %206 = vmatmul.mubr.f32.gmra.mrb[0].mxu0 %v136
    %v207 = vpop.f32.mrb[0].mxu0
    %v208 = vadd.f32 0.0, %v207
    %v209 = vpop.f32.mrb[0].mxu0
    %210 = vmatprep.mubr.f32.mxu0 0.0
    %211 = vmatmul.mubr.f32.gmra.mrb[0].mxu0 %v139
    %v212 = vpop.f32.mrb[0].mxu0
    %v213 = vadd.f32 0.0, %v212
    %v214 = vpop.f32.mrb[0].mxu0
    %215 = vdwg.mxu0
    %vm216 = vcmask 261120
    %v218 = vsel %vm216, %v131, 0
    %v221 = vsel %vm216, %v132, 0
    %223 = vmatprep.subr.mxu0 0.0
    %224 = vmatpush1.msra.mxu0 %v127
    %225 = vmatprep.subr.mxu0 0.0
    %226 = vmatpush1.msra.mxu0 %v128
    %227 = vmatprep.subr.mxu0 0.0
    %228 = vmatpush1.msra.mxu0 %v129
    %229 = vmatprep.subr.mxu0 0.0
    %230 = vmatpush1.msra.mxu0 %v130
    %231 = vmatprep.subr.mxu0 0.0
    %232 = vmatpush1.msra.mxu0 0.0
    %233 = vmatprep.subr.mxu0 0.0
    %234 = vmatpush1.msra.mxu0 0.0
    %235 = vmatprep.subr.mxu0 0.0
    %236 = vmatpush1.msra.mxu0 0.0
    %237 = vmatprep.subr.mxu0 0.0
    %238 = vmatpush1.msra.mxu0 0.0
    %239 = vmatprep.subr.mxu0 0.0
    %240 = vmatpush1.msra.mxu0 0.0
    %241 = vmatprep.subr.mxu0 0.0
    %242 = vmatpush1.msra.mxu0 0.0
    %243 = vmatprep.subr.mxu0 0.0
    %244 = vmatpush1.msra.mxu0 0.0
    %245 = vmatprep.subr.mxu0 0.0
    %246 = vmatpush1.msra.mxu0 0.0
    %247 = vmatprep.subr.mxu0 0.0
    %248 = vmatpush1.msra.mxu0 0.0
    %249 = vmatprep.subr.mxu0 0.0
    %250 = vmatpush1.msra.mxu0 0.0
    %251 = vmatprep.subr.mxu0 0.0
    %252 = vmatpush1.msra.mxu0 0.0
    %253 = vmatprep.subr.mxu0 0.0
    %254 = vmatpush1.msra.mxu0 0.0
    %255 = vmatprep.subr.mxu0 0.0
    %256 = vmatpush1.msra.mxu0 0.0
    %257 = vmatprep.subr.mxu0 0.0
    %258 = vmatpush1.msra.mxu0 0.0
    %259 = vmatprep.subr.mxu0 0.0
    %260 = vmatpush1.msra.mxu0 0.0
    %261 = vmatprep.subr.mxu0 0.0
    %262 = vmatpush1.msra.mxu0 0.0
    %263 = vmatprep.subr.mxu0 0.0
    %264 = vmatpush1.msra.mxu0 0.0
    %265 = vmatprep.subr.mxu0 0.0
    %266 = vmatpush1.msra.mxu0 0.0
    %267 = vmatprep.subr.mxu0 0.0
    %268 = vmatpush1.msra.mxu0 0.0
    %269 = vmatprep.subr.mxu0 0.0
    %270 = vmatpush1.msra.mxu0 0.0
    %271 = vmatprep.subr.mxu0 0.0
    %272 = vmatpush1.msra.mxu0 0.0
    %273 = vmatprep.subr.mxu0 0.0
    %274 = vmatpush1.msra.mxu0 0.0
    %275 = vmatprep.subr.mxu0 0.0
    %276 = vmatpush1.msra.mxu0 0.0
    %277 = vmatprep.subr.mxu0 0.0
    %278 = vmatpush1.msra.mxu0 0.0
    %279 = vmatprep.subr.mxu0 0.0
    %280 = vmatpush1.msra.mxu0 0.0
    %281 = vmatprep.subr.mxu0 0.0
    %282 = vmatpush1.msra.mxu0 0.0
    %283 = vmatprep.subr.mxu0 0.0
    %284 = vmatpush1.msra.mxu0 0.0
    %285 = vmatprep.subr.mxu0 0.0
    %286 = vmatpush1.msra.mxu0 0.0
    %287 = vmatprep.mubr.f32.mxu0 0.0
    %288 = vmatmul.mubr.f32.gmra.mrb[0].mxu0 %v218
    %v289 = vpop.f32.mrb[0].mxu0
    %v290 = vadd.f32 %v208, %v289
    %v291 = vpop.f32.mrb[0].mxu0
    %292 = vmatprep.mubr.f32.mxu0 0.0
    %293 = vmatmul.mubr.f32.gmra.mrb[0].mxu0 %v221
    %v294 = vpop.f32.mrb[0].mxu0
    %v295 = vadd.f32 %v213, %v294
    %v296 = vpop.f32.mrb[0].mxu0
    %297 = vdwg.mxu0
    %298 = vst [vmem:[#allocation2] sm:$0xff] %v290
    %299 = vst [vmem:[#allocation2 + $0x8] sm:$0xff] %v295
    // Predicated region
    $region18: #{tpu_custom_call.1} parent=1 // pred_check
      _
    $region19: #{tpu_custom_call.1} parent=1 // pred_check_branch
      %301 = sbr.rel (0) target = $region21
    $region20: #{tpu_custom_call.1} parent=1 // pred_region
      %s303 = ssub.s32 256, 256
      %304 = vsyncadd [#allocation3], %s303
      %s305 = sshll.u32 [#allocation2], 4
      %s306 = int_to_ptr.vmem [resolvable:$true] %s305
      %311 = dma.vmem_to_hbm [thread:$0]  %s306, 256, %s4, [#allocation3], 128, 128, 8
    $region21: #{tpu_custom_call.1} parent=1 // pred_fallthru
      _
    // Predicated region
    $region22: #{tpu_custom_call.1} parent=1 // pred_check
      _
    $region23: #{tpu_custom_call.1} parent=1 // pred_check_branch
      %313 = sbr.rel (0) target = $region25
    $region24: #{tpu_custom_call.1} parent=1 // pred_region
      %314 = dma.done [#allocation3], 256
    $region25: #{tpu_custom_call.1} parent=1 // pred_fallthru
      _
    %315 = vsyncpa [#allocation3], 1

</llo_original>
